<compile_context>
chip_gen: v5e
topology: v5e:2x2
jax: 0.10.0
libtpu: 0.0.40
codegen_flags: <defaults>
</compile_context>

<pallas_src>
import functools

import jax
import jax.numpy as jnp
from jax import lax
from jax.experimental import pallas as pl
from jax.experimental.pallas import tpu as pltpu


_INV_SQRT2 = 0.7071067811865476


def _gelu_exact(x):
    # PyTorch F.gelu default (erf-based, not the tanh approximation).
    return 0.5 * x * (1.0 + lax.erf(x * _INV_SQRT2))


def _conv_block_kernel(x_hbm, w1_ref, b1_ref, w2_ref, b2_ref, wp_ref, bp_ref,
                       o_ref, x_vmem, dma_sem,
                       *, K, d, pad, l_tile, l_in, l_valid, n_l):
    """One (batch, L-tile) grid step.

    x_hbm   : (B, C_in, l_round + halo_r) bf16 zero-padded input, raw HBM ref.
              window column u <-> global position j*l_tile - 2*pad + u.
    w1      : (C_out, K*C_in) bf16, w2 (C_out, K*C_out) bf16, wp (C_out, C_in) bf16.
    biases  : (C_out, 1) f32.
    o_ref   : (1, C_out, l_tile) f32 output block (lane-dense).
    x_vmem  : (2, C_in, l_in) bf16 double-buffered halo window.
    dma_sem : (2,) DMA semaphores.
    """
    b = pl.program_id(0)
    j = pl.program_id(1)
    l_mid = l_tile + 2 * pad          # conv1 output columns kept (halo for conv2)

    def fetch(jj, slot):
        start = pl.multiple_of(jj * l_tile, 128)
        pltpu.make_async_copy(x_hbm.at[b, :, pl.ds(start, l_in)],
                              x_vmem.at[slot], dma_sem.at[slot]).start()

    # Prime the double buffer once per batch row (megacore-safe: each row primes
    # itself regardless of which TensorCore it lands on).
    @pl.when(j == 0)
    def _():
        fetch(0, 0)
        if n_l > 1:
            fetch(1, 1)

    # Steady state: prefetch tile j+1 into the other slot before computing tile j.
    if n_l > 1:
        @pl.when(jnp.logical_and(j > 0, j + 1 < n_l))
        def _():
            fetch(j + 1, (j + 1) % 2)

    slot = j % 2
    # Wait for the current tile's halo window (wait only uses sem + byte count).
    pltpu.make_async_copy(x_hbm.at[b, :, pl.ds(0, l_in)],
                          x_vmem.at[slot], dma_sem.at[slot]).wait()

    x_bf = x_vmem[slot]                        # (C_in, l_in) bf16
    x = x_bf.astype(jnp.float32)               # f32 activation path

    # --- main path: gelu -> conv1 (all taps fused into one MXU matmul) -------
    h_bf = _gelu_exact(x).astype(jnp.bfloat16)
    taps1 = jnp.concatenate([h_bf[:, k * d: k * d + l_mid] for k in range(K)], axis=0)
    h1 = jnp.dot(w1_ref[...], taps1, preferred_element_type=jnp.float32) + b1_ref[...]

    # Zero the columns outside the real sequence: PyTorch zero-pads conv2's
    # input, whereas the halo-computed h1 is nonzero there (bias + boundary mix).
    col = j * l_tile - pad + lax.broadcasted_iota(jnp.int32, (1, l_mid), 1)
    h1 = jnp.where((col >= 0) & (col < l_valid), h1, 0.0)

    # --- gelu -> conv2 --------------------------------------------------------
    g1_bf = _gelu_exact(h1).astype(jnp.bfloat16)
    taps2 = jnp.concatenate([g1_bf[:, k * d: k * d + l_tile] for k in range(K)], axis=0)
    h2 = jnp.dot(w2_ref[...], taps2, preferred_element_type=jnp.float32) + b2_ref[...]

    # --- residual: 1x1 projector on the un-activated input -------------------
    xr = x_bf[:, 2 * pad: 2 * pad + l_tile]    # (C_in, l_tile) bf16
    res = jnp.dot(wp_ref[...], xr, preferred_element_type=jnp.float32) + bp_ref[...]

    o_ref[0] = (h2 + res).astype(o_ref.dtype)


def conv_block_pallas(x_ncl, w1, b1, w2, b2, wp, bp, *, kernel_size, dilation,
                      l_tile=1024):
    """x_ncl: (B, C_in, L) f32.  Weights in PyTorch Conv1d layout:
    w1 (C_out, C_in, K), w2 (C_out, C_out, K), wp (C_out, C_in, 1), biases (C_out,).
    Returns (B, C_out, L) float32."""
    B, c_in, L = x_ncl.shape
    c_out = w1.shape[0]
    K = kernel_size
    rf = (K - 1) * dilation + 1
    pad = rf // 2

    # L tile: multiple of 128 (lane-dense output), no larger than rounded-up L.
    l_cap = ((L + 127) // 128) * 128
    l_tile = min(max(128, (l_tile // 128) * 128), l_cap)
    n_l = (L + l_tile - 1) // l_tile
    l_round = n_l * l_tile
    halo_r = ((4 * pad + 127) // 128) * 128 if pad > 0 else 0   # lane-aligned halo
    l_in = l_tile + halo_r

    # bf16 zero-padded staging copy: 2*pad left halo; right edge padded so every
    # tile's fixed-width l_in window stays in bounds.  gelu(0) == 0, so these
    # zeros exactly reproduce PyTorch's same-pad zeros for conv1.
    # TODO(synk): fetch halos straight from the unpadded input (clamped DMA start
    # plus an extended column mask) to drop this staging copy entirely.
    x_padded = jnp.pad(x_ncl, ((0, 0), (0, 0),
                               (2 * pad, (l_round + halo_r) - L - 2 * pad))
                       ).astype(jnp.bfloat16)

    # (C_out, C_in, K) -> (C_out, K*C_in); contraction ordered (tap k, channel).
    w1_2d = jnp.transpose(w1, (0, 2, 1)).reshape(c_out, K * c_in).astype(jnp.bfloat16)
    w2_2d = jnp.transpose(w2, (0, 2, 1)).reshape(c_out, K * c_out).astype(jnp.bfloat16)
    wp_2d = wp.reshape(c_out, c_in).astype(jnp.bfloat16)
    b1c = b1.reshape(c_out, 1).astype(jnp.float32)
    b2c = b2.reshape(c_out, 1).astype(jnp.float32)
    bpc = bp.reshape(c_out, 1).astype(jnp.float32)

    kernel = functools.partial(_conv_block_kernel, K=K, d=dilation, pad=pad,
                               l_tile=l_tile, l_in=l_in, l_valid=L, n_l=n_l)

    out = pl.pallas_call(
        kernel,
        out_shape=jax.ShapeDtypeStruct((B, c_out, l_round), jnp.float32),
        grid_spec=pltpu.PrefetchScalarGridSpec(
            num_scalar_prefetch=0,
            grid=(B, n_l),
            in_specs=[
                pl.BlockSpec(memory_space=pl.ANY),                     # x (haloed HBM)
                pl.BlockSpec((c_out, K * c_in), lambda b, j: (0, 0)),  # w1
                pl.BlockSpec((c_out, 1), lambda b, j: (0, 0)),         # b1
                pl.BlockSpec((c_out, K * c_out), lambda b, j: (0, 0)), # w2
                pl.BlockSpec((c_out, 1), lambda b, j: (0, 0)),         # b2
                pl.BlockSpec((c_out, c_in), lambda b, j: (0, 0)),      # wp
                pl.BlockSpec((c_out, 1), lambda b, j: (0, 0)),         # bp
            ],
            out_specs=pl.BlockSpec((1, c_out, l_tile), lambda b, j: (b, 0, j)),
            scratch_shapes=[
                pltpu.VMEM((2, c_in, l_in), jnp.bfloat16),
                pltpu.SemaphoreType.DMA((2,)),
            ],
        ),
        compiler_params=pltpu.CompilerParams(
            # Batch axis feeds both v7x TensorCores; the L axis stays sequential so
            # the per-row double-buffered halo prefetch remains valid.
            dimension_semantics=("parallel", "arbitrary"),
            vmem_limit_bytes=32 * 1024 * 1024,
        ),
    )(x_padded, w1_2d, b1c, w2_2d, b2c, wp_2d, bpc)

    return out[:, :, :L]


# ---------------- pure-JAX reference (mirrors the PyTorch module, f32) ----------------
def _conv_block_ref(x_ncl, w1, b1, w2, b2, wp, bp, *, kernel_size, dilation):
    rf = (kernel_size - 1) * dilation + 1
    pad = rf // 2
    remove = 1 if rf % 2 == 0 else 0

    def same_pad_conv(h, w_oik, b):
        o = lax.conv_general_dilated(
            h, w_oik, window_strides=(1,), padding=[(pad, pad)],
            rhs_dilation=(dilation,), dimension_numbers=("NCH", "OIH", "NCH"))
        o = o + b[None, :, None]
        if remove:
            o = o[:, :, :-remove]
        return o

    residual = lax.conv_general_dilated(
        x_ncl, wp, window_strides=(1,), padding=[(0, 0)],
        dimension_numbers=("NCH", "OIH", "NCH")) + bp[None, :, None]

    h = _gelu_exact(x_ncl)
    h = same_pad_conv(h, w1, b1)
    h = _gelu_exact(h)
    h = same_pad_conv(h, w2, b2)
    return h + residual


def _run_case(key, *, B, c_in, c_out, L, kernel_size, dilation, l_tile, tol):
    kx, k1, kb1, k2, kb2, kp, kbp = jax.random.split(key, 7)
    x = jax.random.normal(kx, (B, c_in, L), dtype=jnp.float32)
    # Parameters in PyTorch Conv1d layout (C_out, C_in, K).
    w1 = jax.random.normal(k1, (c_out, c_in, kernel_size), dtype=jnp.float32) * 0.1
    b1 = jax.random.normal(kb1, (c_out,), dtype=jnp.float32) * 0.1
    w2 = jax.random.normal(k2, (c_out, c_out, kernel_size), dtype=jnp.float32) * 0.1
    b2 = jax.random.normal(kb2, (c_out,), dtype=jnp.float32) * 0.1
    wp = jax.random.normal(kp, (c_out, c_in, 1), dtype=jnp.float32) * 0.1
    bp = jax.random.normal(kbp, (c_out,), dtype=jnp.float32) * 0.1

    out = conv_block_pallas(x, w1, b1, w2, b2, wp, bp,
                            kernel_size=kernel_size, dilation=dilation, l_tile=l_tile)
    out = jax.block_until_ready(out)
    ref = _conv_block_ref(x, w1, b1, w2, b2, wp, bp,
                          kernel_size=kernel_size, dilation=dilation)
    ref = jax.block_until_ready(ref)

    assert out.shape == (B, c_out, L)
    # Tolerance loosened because DMA payload + matmul operands are bf16 (f32 accum).
    max_err = jnp.max(jnp.abs(out - ref))
    assert jnp.allclose(out, ref, atol=tol, rtol=tol), f"max abs err = {max_err}"


if __name__ == "__main__":
    key = jax.random.PRNGKey(0)
    k_a, k_b = jax.random.split(key)

    # Odd receptive field (rf = 5); l_tile=128 forces multiple L tiles, exercising
    # the double-buffered halo DMA, boundary mask, and per-row priming.
    _run_case(k_a, B=2, c_in=8, c_out=16, L=160,
              kernel_size=3, dilation=2, l_tile=128, tol=5e-2)

    # Even receptive field (rf = 2: PyTorch trims the last column), single L tile.
    _run_case(k_b, B=2, c_in=8, c_out=16, L=160,
              kernel_size=2, dilation=1, l_tile=1024, tol=5e-2)

    print("KERNEL_OK")
</pallas_src>

<mosaic_0001>
module attributes {stable_mosaic.version = 11 : i64} {
  func.func @_conv_block_kernel(%arg0: i32, %arg1: i32, %arg2: memref<2x8x384xbf16, #tpu.memory_space<any>>, %arg3: memref<16x24xbf16, #tpu.memory_space<vmem>>, %arg4: memref<16x1xf32, #tpu.memory_space<vmem>>, %arg5: memref<16x48xbf16, #tpu.memory_space<vmem>>, %arg6: memref<16x1xf32, #tpu.memory_space<vmem>>, %arg7: memref<16x8xbf16, #tpu.memory_space<vmem>>, %arg8: memref<16x1xf32, #tpu.memory_space<vmem>>, %arg9: memref<1x16x128xf32, #tpu.memory_space<vmem>>, %arg10: memref<2x8x256xbf16, #tpu.memory_space<vmem>>, %arg11: memref<2x!tpu.dma_semaphore, #tpu.memory_space<semaphore_mem>>) attributes {dimension_semantics = [#tpu.dimension_semantics<parallel>, #tpu.dimension_semantics<arbitrary>], iteration_bounds = array<i64: 2, 2>, scalar_prefetch = 0 : i64, scratch_operands = 2 : i64, tpu.core_type = #tpu.core_type<tc>, window_params = [{}, {pipeline_mode = #tpu.pipeline_mode<synchronous>, transform_indices = @transform_1, window_bounds = array<i64: 16, 24>}, {pipeline_mode = #tpu.pipeline_mode<synchronous>, transform_indices = @transform_2, window_bounds = array<i64: 16, 1>}, {pipeline_mode = #tpu.pipeline_mode<synchronous>, transform_indices = @transform_3, window_bounds = array<i64: 16, 48>}, {pipeline_mode = #tpu.pipeline_mode<synchronous>, transform_indices = @transform_4, window_bounds = array<i64: 16, 1>}, {pipeline_mode = #tpu.pipeline_mode<synchronous>, transform_indices = @transform_5, window_bounds = array<i64: 16, 8>}, {pipeline_mode = #tpu.pipeline_mode<synchronous>, transform_indices = @transform_6, window_bounds = array<i64: 16, 1>}, {transform_indices = @transform_7, window_bounds = array<i64: 1, 16, 128>}]} {
    %c0_i32 = arith.constant 0 : i32
    %0 = arith.cmpi eq, %arg1, %c0_i32 : i32
    %1 = arith.extui %0 : i1 to i32
    %c0_i32_0 = arith.constant 0 : i32
    %2 = arith.cmpi ne, %1, %c0_i32_0 : i32
    scf.if %2 {
      %c0_i32_40 = arith.constant 0 : i32
      %89 = tpu.assume_multiple %c0_i32_40, 128 : i32
      %c0_i32_41 = arith.constant 0 : i32
      %c0_i32_42 = arith.constant 0 : i32
      %c0_i32_43 = arith.constant 0 : i32
      %90 = tpu.memref_slice %arg2[%arg0, %c0_i32_43, %89] : memref<2x8x384xbf16, #tpu.memory_space<any>> -> memref<1x8x256xbf16, #tpu.memory_space<any>>
      %91 = tpu.memref_squeeze %90 : memref<1x8x256xbf16, #tpu.memory_space<any>> -> memref<8x256xbf16, #tpu.memory_space<any>>
      %c0_i32_44 = arith.constant 0 : i32
      %c0_i32_45 = arith.constant 0 : i32
      %92 = tpu.memref_slice %arg10[%c0_i32_41, %c0_i32_44, %c0_i32_45] : memref<2x8x256xbf16, #tpu.memory_space<vmem>> -> memref<1x8x256xbf16, #tpu.memory_space<vmem>>
      %93 = tpu.memref_squeeze %92 : memref<1x8x256xbf16, #tpu.memory_space<vmem>> -> memref<8x256xbf16, #tpu.memory_space<vmem>>
      %94 = tpu.memref_slice %arg11[%c0_i32_42] : memref<2x!tpu.dma_semaphore, #tpu.memory_space<semaphore_mem>> -> memref<1x!tpu.dma_semaphore, #tpu.memory_space<semaphore_mem>>
      %95 = tpu.memref_squeeze %94 : memref<1x!tpu.dma_semaphore, #tpu.memory_space<semaphore_mem>> -> memref<!tpu.dma_semaphore, #tpu.memory_space<semaphore_mem>>
      tpu.enqueue_dma source(%91 : memref<8x256xbf16, #tpu.memory_space<any>>) target(%93 : memref<8x256xbf16, #tpu.memory_space<vmem>>) target_semaphore(%95 : memref<!tpu.dma_semaphore, #tpu.memory_space<semaphore_mem>>)
      %c128_i32_46 = arith.constant 128 : i32
      %96 = tpu.assume_multiple %c128_i32_46, 128 : i32
      %c1_i32_47 = arith.constant 1 : i32
      %c1_i32_48 = arith.constant 1 : i32
      %c0_i32_49 = arith.constant 0 : i32
      %97 = tpu.memref_slice %arg2[%arg0, %c0_i32_49, %96] : memref<2x8x384xbf16, #tpu.memory_space<any>> -> memref<1x8x256xbf16, #tpu.memory_space<any>>
      %98 = tpu.memref_squeeze %97 : memref<1x8x256xbf16, #tpu.memory_space<any>> -> memref<8x256xbf16, #tpu.memory_space<any>>
      %c0_i32_50 = arith.constant 0 : i32
      %c0_i32_51 = arith.constant 0 : i32
      %99 = tpu.memref_slice %arg10[%c1_i32_47, %c0_i32_50, %c0_i32_51] : memref<2x8x256xbf16, #tpu.memory_space<vmem>> -> memref<1x8x256xbf16, #tpu.memory_space<vmem>>
      %100 = tpu.memref_squeeze %99 : memref<1x8x256xbf16, #tpu.memory_space<vmem>> -> memref<8x256xbf16, #tpu.memory_space<vmem>>
      %101 = tpu.memref_slice %arg11[%c1_i32_48] : memref<2x!tpu.dma_semaphore, #tpu.memory_space<semaphore_mem>> -> memref<1x!tpu.dma_semaphore, #tpu.memory_space<semaphore_mem>>
      %102 = tpu.memref_squeeze %101 : memref<1x!tpu.dma_semaphore, #tpu.memory_space<semaphore_mem>> -> memref<!tpu.dma_semaphore, #tpu.memory_space<semaphore_mem>>
      tpu.enqueue_dma source(%98 : memref<8x256xbf16, #tpu.memory_space<any>>) target(%100 : memref<8x256xbf16, #tpu.memory_space<vmem>>) target_semaphore(%102 : memref<!tpu.dma_semaphore, #tpu.memory_space<semaphore_mem>>)
    } else {
    }
    %c0_i32_1 = arith.constant 0 : i32
    %3 = arith.cmpi sgt, %arg1, %c0_i32_1 : i32
    %c1_i32 = arith.constant 1 : i32
    %4 = arith.addi %arg1, %c1_i32 : i32
    %c2_i32 = arith.constant 2 : i32
    %5 = arith.cmpi slt, %4, %c2_i32 : i32
    %6 = arith.andi %3, %5 : i1
    %7 = arith.extui %6 : i1 to i32
    %c0_i32_2 = arith.constant 0 : i32
    %8 = arith.cmpi ne, %7, %c0_i32_2 : i32
    scf.if %8 {
      %c1_i32_40 = arith.constant 1 : i32
      %89 = arith.addi %arg1, %c1_i32_40 : i32
      %c1_i32_41 = arith.constant 1 : i32
      %90 = arith.addi %arg1, %c1_i32_41 : i32
      %c2_i32_42 = arith.constant 2 : i32
      %c0_i32_43 = arith.constant 0 : i32
      %91 = arith.cmpi eq, %c2_i32_42, %c0_i32_43 : i32
      %c1_i32_44 = arith.constant 1 : i32
      %92 = arith.select %91, %c1_i32_44, %c2_i32_42 : i32
      %93 = arith.remsi %90, %92 : i32
      %c0_i32_45 = arith.constant 0 : i32
      %94 = arith.cmpi ne, %93, %c0_i32_45 : i32
      %c0_i32_46 = arith.constant 0 : i32
      %95 = arith.cmpi slt, %93, %c0_i32_46 : i32
      %c0_i32_47 = arith.constant 0 : i32
      %96 = arith.cmpi slt, %92, %c0_i32_47 : i32
      %97 = arith.xori %95, %96 : i1
      %98 = arith.andi %97, %94 : i1
      %99 = arith.addi %93, %92 : i32
      %100 = arith.select %98, %99, %93 : i32
      %c128_i32_48 = arith.constant 128 : i32
      %101 = arith.muli %89, %c128_i32_48 : i32
      %102 = tpu.assume_multiple %101, 128 : i32
      %c0_i32_49 = arith.constant 0 : i32
      %103 = tpu.memref_slice %arg2[%arg0, %c0_i32_49, %102] : memref<2x8x384xbf16, #tpu.memory_space<any>> -> memref<1x8x256xbf16, #tpu.memory_space<any>>
      %104 = tpu.memref_squeeze %103 : memref<1x8x256xbf16, #tpu.memory_space<any>> -> memref<8x256xbf16, #tpu.memory_space<any>>
      %c0_i32_50 = arith.constant 0 : i32
      %c0_i32_51 = arith.constant 0 : i32
      %105 = tpu.memref_slice %arg10[%100, %c0_i32_50, %c0_i32_51] : memref<2x8x256xbf16, #tpu.memory_space<vmem>> -> memref<1x8x256xbf16, #tpu.memory_space<vmem>>
      %106 = tpu.memref_squeeze %105 : memref<1x8x256xbf16, #tpu.memory_space<vmem>> -> memref<8x256xbf16, #tpu.memory_space<vmem>>
      %107 = tpu.memref_slice %arg11[%100] : memref<2x!tpu.dma_semaphore, #tpu.memory_space<semaphore_mem>> -> memref<1x!tpu.dma_semaphore, #tpu.memory_space<semaphore_mem>>
      %108 = tpu.memref_squeeze %107 : memref<1x!tpu.dma_semaphore, #tpu.memory_space<semaphore_mem>> -> memref<!tpu.dma_semaphore, #tpu.memory_space<semaphore_mem>>
      tpu.enqueue_dma source(%104 : memref<8x256xbf16, #tpu.memory_space<any>>) target(%106 : memref<8x256xbf16, #tpu.memory_space<vmem>>) target_semaphore(%108 : memref<!tpu.dma_semaphore, #tpu.memory_space<semaphore_mem>>)
    } else {
    }
    %c2_i32_3 = arith.constant 2 : i32
    %c0_i32_4 = arith.constant 0 : i32
    %9 = arith.cmpi eq, %c2_i32_3, %c0_i32_4 : i32
    %c1_i32_5 = arith.constant 1 : i32
    %10 = arith.select %9, %c1_i32_5, %c2_i32_3 : i32
    %11 = arith.remsi %arg1, %10 : i32
    %c0_i32_6 = arith.constant 0 : i32
    %12 = arith.cmpi ne, %11, %c0_i32_6 : i32
    %c0_i32_7 = arith.constant 0 : i32
    %13 = arith.cmpi slt, %11, %c0_i32_7 : i32
    %c0_i32_8 = arith.constant 0 : i32
    %14 = arith.cmpi slt, %10, %c0_i32_8 : i32
    %15 = arith.xori %13, %14 : i1
    %16 = arith.andi %15, %12 : i1
    %17 = arith.addi %11, %10 : i32
    %18 = arith.select %16, %17, %11 : i32
    %c0_i32_9 = arith.constant 0 : i32
    %c0_i32_10 = arith.constant 0 : i32
    %19 = tpu.memref_slice %arg2[%arg0, %c0_i32_9, %c0_i32_10] : memref<2x8x384xbf16, #tpu.memory_space<any>> -> memref<1x8x256xbf16, #tpu.memory_space<any>>
    %20 = tpu.memref_squeeze %19 : memref<1x8x256xbf16, #tpu.memory_space<any>> -> memref<8x256xbf16, #tpu.memory_space<any>>
    %c0_i32_11 = arith.constant 0 : i32
    %c0_i32_12 = arith.constant 0 : i32
    %21 = tpu.memref_slice %arg10[%18, %c0_i32_11, %c0_i32_12] : memref<2x8x256xbf16, #tpu.memory_space<vmem>> -> memref<1x8x256xbf16, #tpu.memory_space<vmem>>
    %22 = tpu.memref_squeeze %21 : memref<1x8x256xbf16, #tpu.memory_space<vmem>> -> memref<8x256xbf16, #tpu.memory_space<vmem>>
    %23 = tpu.memref_slice %arg11[%18] : memref<2x!tpu.dma_semaphore, #tpu.memory_space<semaphore_mem>> -> memref<1x!tpu.dma_semaphore, #tpu.memory_space<semaphore_mem>>
    %24 = tpu.memref_squeeze %23 : memref<1x!tpu.dma_semaphore, #tpu.memory_space<semaphore_mem>> -> memref<!tpu.dma_semaphore, #tpu.memory_space<semaphore_mem>>
    tpu.wait_dma2 semaphore(%24 : memref<!tpu.dma_semaphore, #tpu.memory_space<semaphore_mem>>) src(%20 : memref<8x256xbf16, #tpu.memory_space<any>>) dst(%22 : memref<8x256xbf16, #tpu.memory_space<vmem>>)
    %25 = arith.index_cast %18 : i32 to index
    %c0 = arith.constant 0 : index
    %c0_13 = arith.constant 0 : index
    %26 = vector.load %arg10[%25, %c0, %c0_13] : memref<2x8x256xbf16, #tpu.memory_space<vmem>>, vector<1x8x256xbf16>
    %27 = vector.shape_cast %26 : vector<1x8x256xbf16> to vector<8x256xbf16>
    %28 = arith.extf %27 : vector<8x256xbf16> to vector<8x256xf32>
    %cst = arith.constant 5.000000e-01 : f32
    %29 = vector.broadcast %cst : f32 to vector<8x256xf32>
    %30 = arith.mulf %29, %28 : vector<8x256xf32>
    %cst_14 = arith.constant 0.707106769 : f32
    %31 = vector.broadcast %cst_14 : f32 to vector<8x256xf32>
    %32 = arith.mulf %28, %31 : vector<8x256xf32>
    %33 = math.erf %32 : vector<8x256xf32>
    %cst_15 = arith.constant 1.000000e+00 : f32
    %34 = vector.broadcast %cst_15 : f32 to vector<8x256xf32>
    %35 = arith.addf %34, %33 : vector<8x256xf32>
    %36 = arith.mulf %30, %35 : vector<8x256xf32>
    %37 = arith.truncf %36 : vector<8x256xf32> to vector<8x256xbf16>
    %38 = vector.extract_strided_slice %37 {offsets = [0, 0], sizes = [8, 132], strides = [1, 1]} : vector<8x256xbf16> to vector<8x132xbf16>
    %39 = vector.extract_strided_slice %37 {offsets = [0, 2], sizes = [8, 132], strides = [1, 1]} : vector<8x256xbf16> to vector<8x132xbf16>
    %40 = vector.extract_strided_slice %37 {offsets = [0, 4], sizes = [8, 132], strides = [1, 1]} : vector<8x256xbf16> to vector<8x132xbf16>
    %41 = tpu.concatenate %38, %39, %40 in 0 : vector<8x132xbf16>, vector<8x132xbf16>, vector<8x132xbf16> -> vector<24x132xbf16>
    %c0_16 = arith.constant 0 : index
    %c0_17 = arith.constant 0 : index
    %42 = vector.load %arg3[%c0_16, %c0_17] : memref<16x24xbf16, #tpu.memory_space<vmem>>, vector<16x24xbf16>
    %cst_18 = arith.constant dense<0.000000e+00> : vector<16x132xf32>
    %43 = tpu.matmul %42, %41, %cst_18 {dimension_numbers = #tpu.dot_dimension_numbers<[1], [0], [0], [1], [0, 0, 1, 1], [], []>} : vector<16x24xbf16>, vector<24x132xbf16>, vector<16x132xf32> -> vector<16x132xf32>
    %c0_19 = arith.constant 0 : index
    %c0_20 = arith.constant 0 : index
    %44 = vector.load %arg4[%c0_19, %c0_20] : memref<16x1xf32, #tpu.memory_space<vmem>>, vector<16x1xf32>
    %45 = vector.broadcast %44 : vector<16x1xf32> to vector<16x132xf32>
    %46 = arith.addf %43, %45 : vector<16x132xf32>
    %c128_i32 = arith.constant 128 : i32
    %47 = arith.muli %arg1, %c128_i32 : i32
    %c2_i32_21 = arith.constant 2 : i32
    %48 = arith.subi %47, %c2_i32_21 : i32
    %49 = tpu.iota {dimensions = array<i32: 1>} : vector<1x132xi32>
    %50 = vector.broadcast %48 : i32 to vector<1x132xi32>
    %51 = arith.addi %50, %49 : vector<1x132xi32>
    %c0_i32_22 = arith.constant 0 : i32
    %52 = vector.broadcast %c0_i32_22 : i32 to vector<1x132xi32>
    %53 = arith.cmpi sge, %51, %52 : vector<1x132xi32>
    %c160_i32 = arith.constant 160 : i32
    %54 = vector.broadcast %c160_i32 : i32 to vector<1x132xi32>
    %55 = arith.cmpi slt, %51, %54 : vector<1x132xi32>
    %56 = arith.andi %53, %55 : vector<1x132xi1>
    %cst_23 = arith.constant 0.000000e+00 : f32
    %57 = vector.shape_cast %56 : vector<1x132xi1> to vector<1x132xi1>
    %58 = vector.broadcast %57 : vector<1x132xi1> to vector<16x132xi1>
    %59 = vector.broadcast %cst_23 : f32 to vector<16x132xf32>
    %60 = arith.select %58, %46, %59 : vector<16x132xi1>, vector<16x132xf32>
    %cst_24 = arith.constant 5.000000e-01 : f32
    %61 = vector.broadcast %cst_24 : f32 to vector<16x132xf32>
    %62 = arith.mulf %61, %60 : vector<16x132xf32>
    %cst_25 = arith.constant 0.707106769 : f32
    %63 = vector.broadcast %cst_25 : f32 to vector<16x132xf32>
    %64 = arith.mulf %60, %63 : vector<16x132xf32>
    %65 = math.erf %64 : vector<16x132xf32>
    %cst_26 = arith.constant 1.000000e+00 : f32
    %66 = vector.broadcast %cst_26 : f32 to vector<16x132xf32>
    %67 = arith.addf %66, %65 : vector<16x132xf32>
    %68 = arith.mulf %62, %67 : vector<16x132xf32>
    %69 = arith.truncf %68 : vector<16x132xf32> to vector<16x132xbf16>
    %70 = vector.extract_strided_slice %69 {offsets = [0, 0], sizes = [16, 128], strides = [1, 1]} : vector<16x132xbf16> to vector<16x128xbf16>
    %71 = vector.extract_strided_slice %69 {offsets = [0, 2], sizes = [16, 128], strides = [1, 1]} : vector<16x132xbf16> to vector<16x128xbf16>
    %72 = vector.extract_strided_slice %69 {offsets = [0, 4], sizes = [16, 128], strides = [1, 1]} : vector<16x132xbf16> to vector<16x128xbf16>
    %73 = tpu.concatenate %70, %71, %72 in 0 : vector<16x128xbf16>, vector<16x128xbf16>, vector<16x128xbf16> -> vector<48x128xbf16>
    %c0_27 = arith.constant 0 : index
    %c0_28 = arith.constant 0 : index
    %74 = vector.load %arg5[%c0_27, %c0_28] : memref<16x48xbf16, #tpu.memory_space<vmem>>, vector<16x48xbf16>
    %cst_29 = arith.constant dense<0.000000e+00> : vector<16x128xf32>
    %75 = tpu.matmul %74, %73, %cst_29 {dimension_numbers = #tpu.dot_dimension_numbers<[1], [0], [0], [1], [0, 0, 1, 1], [], []>} : vector<16x48xbf16>, vector<48x128xbf16>, vector<16x128xf32> -> vector<16x128xf32>
    %c0_30 = arith.constant 0 : index
    %c0_31 = arith.constant 0 : index
    %76 = vector.load %arg6[%c0_30, %c0_31] : memref<16x1xf32, #tpu.memory_space<vmem>>, vector<16x1xf32>
    %77 = vector.broadcast %76 : vector<16x1xf32> to vector<16x128xf32>
    %78 = arith.addf %75, %77 : vector<16x128xf32>
    %79 = vector.extract_strided_slice %27 {offsets = [0, 4], sizes = [8, 128], strides = [1, 1]} : vector<8x256xbf16> to vector<8x128xbf16>
    %c0_32 = arith.constant 0 : index
    %c0_33 = arith.constant 0 : index
    %80 = vector.load %arg7[%c0_32, %c0_33] : memref<16x8xbf16, #tpu.memory_space<vmem>>, vector<16x8xbf16>
    %cst_34 = arith.constant dense<0.000000e+00> : vector<16x128xf32>
    %81 = tpu.matmul %80, %79, %cst_34 {dimension_numbers = #tpu.dot_dimension_numbers<[1], [0], [0], [1], [0, 0, 1, 1], [], []>} : vector<16x8xbf16>, vector<8x128xbf16>, vector<16x128xf32> -> vector<16x128xf32>
    %c0_35 = arith.constant 0 : index
    %c0_36 = arith.constant 0 : index
    %82 = vector.load %arg8[%c0_35, %c0_36] : memref<16x1xf32, #tpu.memory_space<vmem>>, vector<16x1xf32>
    %83 = vector.broadcast %82 : vector<16x1xf32> to vector<16x128xf32>
    %84 = arith.addf %81, %83 : vector<16x128xf32>
    %85 = arith.addf %78, %84 : vector<16x128xf32>
    %c0_37 = arith.constant 0 : index
    %c0_38 = arith.constant 0 : index
    %c0_39 = arith.constant 0 : index
    %86 = vector.load %arg9[%c0_37, %c0_38, %c0_39] : memref<1x16x128xf32, #tpu.memory_space<vmem>>, vector<1x16x128xf32>
    %87 = vector.shape_cast %86 : vector<1x16x128xf32> to vector<16x128xf32>
    %88 = vector.shape_cast %85 : vector<16x128xf32> to vector<1x16x128xf32>
    tpu.vector_store %arg9[%c0_37, %c0_38, %c0_39], %88 {strides = array<i32>} : memref<1x16x128xf32, #tpu.memory_space<vmem>>, vector<1x16x128xf32>,
    return
  }
  func.func @transform_1(%arg0: i32, %arg1: i32) -> (i32, i32) {
    %c0_i32 = arith.constant 0 : i32
    %c0_i32_0 = arith.constant 0 : i32
    %c0_i32_1 = arith.constant 0 : i32
    return %c0_i32, %c0_i32_0 : i32, i32
  }
  func.func @transform_2(%arg0: i32, %arg1: i32) -> (i32, i32) {
    %c0_i32 = arith.constant 0 : i32
    %c0_i32_0 = arith.constant 0 : i32
    %c0_i32_1 = arith.constant 0 : i32
    return %c0_i32, %c0_i32_0 : i32, i32
  }
  func.func @transform_3(%arg0: i32, %arg1: i32) -> (i32, i32) {
    %c0_i32 = arith.constant 0 : i32
    %c0_i32_0 = arith.constant 0 : i32
    %c0_i32_1 = arith.constant 0 : i32
    return %c0_i32, %c0_i32_0 : i32, i32
  }
  func.func @transform_4(%arg0: i32, %arg1: i32) -> (i32, i32) {
    %c0_i32 = arith.constant 0 : i32
    %c0_i32_0 = arith.constant 0 : i32
    %c0_i32_1 = arith.constant 0 : i32
    return %c0_i32, %c0_i32_0 : i32, i32
  }
  func.func @transform_5(%arg0: i32, %arg1: i32) -> (i32, i32) {
    %c0_i32 = arith.constant 0 : i32
    %c0_i32_0 = arith.constant 0 : i32
    %c0_i32_1 = arith.constant 0 : i32
    return %c0_i32, %c0_i32_0 : i32, i32
  }
  func.func @transform_6(%arg0: i32, %arg1: i32) -> (i32, i32) {
    %c0_i32 = arith.constant 0 : i32
    %c0_i32_0 = arith.constant 0 : i32
    %c0_i32_1 = arith.constant 0 : i32
    return %c0_i32, %c0_i32_0 : i32, i32
  }
  func.func @transform_7(%arg0: i32, %arg1: i32) -> (i32, i32, i32) {
    %c0_i32 = arith.constant 0 : i32
    %c0_i32_0 = arith.constant 0 : i32
    return %arg0, %c0_i32, %arg1 : i32, i32, i32
  }
}

</mosaic_0001>

<llo_original>
// kernel: tpu_custom_call.1
$region0: #{tpu_custom_call.1}
  #allocation0 [shape = 'u32[]', space=smem, size = 0x4, offset = 0x4, fixed_abs, tag = 'smem constant byte address 0x4 - core index']
  #allocation1 [shape = 'u32[72,128]{1,0:T(1,128)}', space=vmem, size = 0x9000, scoped, tag = 'internal scratch']
  #allocation2 [shape = 'bf16[2,8,256]{2,1,0:T(8,128)(2,1)}', space=vmem, size = 0x2000, scoped, tag = 'scratch operand']
  #allocation3 [shape = 's32[2]{0}', space=sflag, size = 0x8, scoped, tag = 'scratch operand']
  #allocation6 [shape = 's32[]', space=sflag, size = 0x4, offset = 0, fixed_abs, tag = 'sflag constant byte address 0x0 - dummy sync flag']
  #allocation7 [shape = 's32[]', space=sflag, size = 0x4, offset = 0, fixed_abs, tag = 'sflag constant byte address 0x0 - dummy sync flag']
  #allocation8 [shape = 's32[]', space=sflag, size = 0x4, offset = 0, fixed_abs, tag = 'sflag constant byte address 0x0 - dummy sync flag']
  %s0 = inlined_call_operand.vmem [shape: bf16[2,8,384], index: 0, kind: input, shape index: {}]
  %s1 = inlined_call_operand.vmem [shape: bf16[16,24], index: 1, kind: input, shape index: {}]
  %s2 = inlined_call_operand.vmem [shape: f32[16,1], index: 2, kind: input, shape index: {}]
  %s3 = inlined_call_operand.vmem [shape: bf16[16,48], index: 3, kind: input, shape index: {}]
  %s4 = inlined_call_operand.vmem [shape: f32[16,1], index: 4, kind: input, shape index: {}]
  %s5 = inlined_call_operand.vmem [shape: bf16[16,8], index: 5, kind: input, shape index: {}]
  %s6 = inlined_call_operand.vmem [shape: f32[16,1], index: 6, kind: input, shape index: {}]
  %s7 = inlined_call_operand.hbm [shape: f32[2,16,256], index: 7, kind: output, shape index: {}]
  %s8 = sld [smem:[#allocation0]]
  $region167: #{tpu_custom_call.1} parent=0
    _
  %s10 = ssub.s32 1, %s8
  %s11 = scalar_select 0, %s10, %s8
  $region1: #{tpu_custom_call.1} parent=0
    #allocation4 [shape = 'u8[16384]{0}', space=vmem, size = 0x4000, scoped, tag = 'output window, operand 0']
    #allocation5 [shape = 's32[2]{0}', space=sflag, size = 0x8, scoped, tag = 'scoped memory for tpu_custom_call.1']
    %12 = vsyncpa [#allocation5], 0
    %s13 = scalar_lea.sflag [#allocation5], 1
    %14 = vsyncpa %s13, 0
    loop: start=0, step=1, limit=6
    $region2: #{tpu_custom_call.1} parent=1 // loop_pre_header
      _
    $region3: #{tpu_custom_call.1} parent=1 // loop_header
      %s16 = sphi 0, %s20
      %p17 = scmp.ge.s32.totalorder %s16, 6
      %s23 = sphi 0, %s35
      %s24 = sphi 0, %s31
      %s25 = sphi 0, %s23
      %s26 = sphi 0, %s24
      %s27 = sphi 0, %s25
      %s28 = sphi 0, %s26
      %s36 = sphi 0, %s36
      %s38 = sphi 0, %s36
      %s39 = sphi 0, %s38
      %s53 = sphi 0, %s39
      %s57 = sphi 0, %s57
      %s59 = sphi 0, %s57
      %s60 = sphi 0, %s59
      %s74 = sphi 0, %s60
      %s78 = sphi 0, %s78
      %s80 = sphi 0, %s78
      %s81 = sphi 0, %s80
      %s95 = sphi 0, %s81
      %s99 = sphi 0, %s99
      %s101 = sphi 0, %s99
      %s102 = sphi 0, %s101
      %s116 = sphi 0, %s102
      %s120 = sphi 0, %s120
      %s122 = sphi 0, %s120
      %s123 = sphi 0, %s122
      %s137 = sphi 0, %s123
      %s141 = sphi 0, %s141
      %s143 = sphi 0, %s141
      %s144 = sphi 0, %s143
      %s158 = sphi 0, %s144
      %s166 = sphi 0, %s168
      %s169 = sphi 0, %s166
      %s170 = sphi 0, %s169
      %s186 = sphi 0, %s170
    $region4: #{tpu_custom_call.1} parent=1 // loop_header_branch
      %19 = sbr.rel (%p17) target = $region8
    $region5: #{tpu_custom_call.1} parent=1 // loop_body
      %s21 = ssub.s32 %s16, 1
      %s22 = ssub.s32 %s16, 2
      %s29 = sadd.s32 1, %s24
      %p30 = scmp.ge.s32.totalorder %s29, 2
      %s31 = scalar_select %p30, 0, %s29
      %s32 = sadd.s32 1, %s23
      %s33 = scalar_select %p30, %s32, %s23
      %p34 = scmp.ge.s32.totalorder %s33, 2
      %s35 = scalar_select %p34, 0, %s33
      %s37 = sadd.s32 %s36, 1
      %p40 = scmp.eq.s32.totalorder %s16, 3
      %p41 = scmp.ne.s32.totalorder %s36, %s38
      %p42 = scmp.eq.s32.totalorder %s16, 0
      %p43 = por %p41, %p42
      %p44 = scmp.ne.s32.totalorder %s36, %s38
      %p45 = scmp.eq.s32.totalorder %s21, 3
      %p46 = por %p44, %p45
      %p47 = scmp.ne.s32.totalorder %s38, %s39
      %p48 = scmp.eq.s32.totalorder %s21, 0
      %p49 = por %p47, %p48
      %p50 = scmp.ne.s32.totalorder %s38, %s39
      %p51 = scmp.eq.s32.totalorder %s22, 3
      %p52 = por %p50, %p51
      %p54 = scmp.ne.s32.totalorder %s39, %s53
      %p55 = scmp.eq.s32.totalorder %s22, 0
      %p56 = por %p54, %p55
      %s58 = sadd.s32 %s57, 1
      %p61 = scmp.eq.s32.totalorder %s16, 3
      %p62 = scmp.ne.s32.totalorder %s57, %s59
      %p63 = scmp.eq.s32.totalorder %s16, 0
      %p64 = por %p62, %p63
      %p65 = scmp.ne.s32.totalorder %s57, %s59
      %p66 = scmp.eq.s32.totalorder %s21, 3
      %p67 = por %p65, %p66
      %p68 = scmp.ne.s32.totalorder %s59, %s60
      %p69 = scmp.eq.s32.totalorder %s21, 0
      %p70 = por %p68, %p69
      %p71 = scmp.ne.s32.totalorder %s59, %s60
      %p72 = scmp.eq.s32.totalorder %s22, 3
      %p73 = por %p71, %p72
      %p75 = scmp.ne.s32.totalorder %s60, %s74
      %p76 = scmp.eq.s32.totalorder %s22, 0
      %p77 = por %p75, %p76
      %s79 = sadd.s32 %s78, 1
      %p82 = scmp.eq.s32.totalorder %s16, 3
      %p83 = scmp.ne.s32.totalorder %s78, %s80
      %p84 = scmp.eq.s32.totalorder %s16, 0
      %p85 = por %p83, %p84
      %p86 = scmp.ne.s32.totalorder %s78, %s80
      %p87 = scmp.eq.s32.totalorder %s21, 3
      %p88 = por %p86, %p87
      %p89 = scmp.ne.s32.totalorder %s80, %s81
      %p90 = scmp.eq.s32.totalorder %s21, 0
      %p91 = por %p89, %p90
      %p92 = scmp.ne.s32.totalorder %s80, %s81
      %p93 = scmp.eq.s32.totalorder %s22, 3
      %p94 = por %p92, %p93
      %p96 = scmp.ne.s32.totalorder %s81, %s95
      %p97 = scmp.eq.s32.totalorder %s22, 0
      %p98 = por %p96, %p97
      %s100 = sadd.s32 %s99, 1
      %p103 = scmp.eq.s32.totalorder %s16, 3
      %p104 = scmp.ne.s32.totalorder %s99, %s101
      %p105 = scmp.eq.s32.totalorder %s16, 0
      %p106 = por %p104, %p105
      %p107 = scmp.ne.s32.totalorder %s99, %s101
      %p108 = scmp.eq.s32.totalorder %s21, 3
      %p109 = por %p107, %p108
      %p110 = scmp.ne.s32.totalorder %s101, %s102
      %p111 = scmp.eq.s32.totalorder %s21, 0
      %p112 = por %p110, %p111
      %p113 = scmp.ne.s32.totalorder %s101, %s102
      %p114 = scmp.eq.s32.totalorder %s22, 3
      %p115 = por %p113, %p114
      %p117 = scmp.ne.s32.totalorder %s102, %s116
      %p118 = scmp.eq.s32.totalorder %s22, 0
      %p119 = por %p117, %p118
      %s121 = sadd.s32 %s120, 1
      %p124 = scmp.eq.s32.totalorder %s16, 3
      %p125 = scmp.ne.s32.totalorder %s120, %s122
      %p126 = scmp.eq.s32.totalorder %s16, 0
      %p127 = por %p125, %p126
      %p128 = scmp.ne.s32.totalorder %s120, %s122
      %p129 = scmp.eq.s32.totalorder %s21, 3
      %p130 = por %p128, %p129
      %p131 = scmp.ne.s32.totalorder %s122, %s123
      %p132 = scmp.eq.s32.totalorder %s21, 0
      %p133 = por %p131, %p132
      %p134 = scmp.ne.s32.totalorder %s122, %s123
      %p135 = scmp.eq.s32.totalorder %s22, 3
      %p136 = por %p134, %p135
      %p138 = scmp.ne.s32.totalorder %s123, %s137
      %p139 = scmp.eq.s32.totalorder %s22, 0
      %p140 = por %p138, %p139
      %s142 = sadd.s32 %s141, 1
      %p145 = scmp.eq.s32.totalorder %s16, 3
      %p146 = scmp.ne.s32.totalorder %s141, %s143
      %p147 = scmp.eq.s32.totalorder %s16, 0
      %p148 = por %p146, %p147
      %p149 = scmp.ne.s32.totalorder %s141, %s143
      %p150 = scmp.eq.s32.totalorder %s21, 3
      %p151 = por %p149, %p150
      %p152 = scmp.ne.s32.totalorder %s143, %s144
      %p153 = scmp.eq.s32.totalorder %s21, 0
      %p154 = por %p152, %p153
      %p155 = scmp.ne.s32.totalorder %s143, %s144
      %p156 = scmp.eq.s32.totalorder %s22, 3
      %p157 = por %p155, %p156
      %p159 = scmp.ne.s32.totalorder %s144, %s158
      %p160 = scmp.eq.s32.totalorder %s22, 0
      %p161 = por %p159, %p160
      %s162 = ssub.s32 %s23, %s35
      %s163 = ssub.s32 %s24, %s31
      %s164 = sor.u32 %s162, %s163
      %p165 = scmp.eq.s32.totalorder %s164, 0
      %s167 = sadd.s32 %s166, 1
      %s168 = scalar_select %p165, %s166, %s167
      %p171 = pneg %p165
      %p172 = scmp.eq.s32.totalorder %s16, 3
      %p173 = por %p171, %p172
      %p174 = scmp.ne.s32.totalorder %s166, %s169
      %p175 = scmp.eq.s32.totalorder %s16, 0
      %p176 = por %p174, %p175
      %p177 = scmp.ne.s32.totalorder %s166, %s169
      %p178 = scmp.eq.s32.totalorder %s21, 3
      %p179 = por %p177, %p178
      %p180 = scmp.ne.s32.totalorder %s169, %s170
      %p181 = scmp.eq.s32.totalorder %s21, 0
      %p182 = por %p180, %p181
      %p183 = scmp.ne.s32.totalorder %s169, %s170
      %p184 = scmp.eq.s32.totalorder %s22, 3
      %p185 = por %p183, %p184
      %p187 = scmp.ne.s32.totalorder %s170, %s186
      %p188 = scmp.eq.s32.totalorder %s22, 0
      %p189 = por %p187, %p188
      %p190 = scmp.le.s32.totalorder 1, %s16
      %p191 = scmp.lt.s32.totalorder %s16, 5
      %p192 = pnand %p190, %p191
      %p193 = pneg %p192
      // Predicated region
      $region9: #{tpu_custom_call.1} parent=5 // pred_check
        _
      $region10: #{tpu_custom_call.1} parent=5 // pred_check_branch
        %195 = sbr.rel (%p192) target = $region12
      $region11: #{tpu_custom_call.1} parent=5 // pred_region
        %s196 = ssub.s32 %s16, 1
        // Predicated region
        $region13: #{tpu_custom_call.1} parent=11 // pred_check
          %p197 = pneg %p49
        $region14: #{tpu_custom_call.1} parent=11 // pred_check_branch
          %199 = sbr.rel (%p197) target = $region16
        $region15: #{tpu_custom_call.1} parent=11 // pred_region
          _
        $region16: #{tpu_custom_call.1} parent=11 // pred_fallthru
          _
        // Predicated region
        $region17: #{tpu_custom_call.1} parent=11 // pred_check
          %p200 = pneg %p70
        $region18: #{tpu_custom_call.1} parent=11 // pred_check_branch
          %202 = sbr.rel (%p200) target = $region20
        $region19: #{tpu_custom_call.1} parent=11 // pred_region
          _
        $region20: #{tpu_custom_call.1} parent=11 // pred_fallthru
          _
        // Predicated region
        $region21: #{tpu_custom_call.1} parent=11 // pred_check
          %p203 = pneg %p91
        $region22: #{tpu_custom_call.1} parent=11 // pred_check_branch
          %205 = sbr.rel (%p203) target = $region24
        $region23: #{tpu_custom_call.1} parent=11 // pred_region
          _
        $region24: #{tpu_custom_call.1} parent=11 // pred_fallthru
          _
        // Predicated region
        $region25: #{tpu_custom_call.1} parent=11 // pred_check
          %p206 = pneg %p112
        $region26: #{tpu_custom_call.1} parent=11 // pred_check_branch
          %208 = sbr.rel (%p206) target = $region28
        $region27: #{tpu_custom_call.1} parent=11 // pred_region
          _
        $region28: #{tpu_custom_call.1} parent=11 // pred_fallthru
          _
        // Predicated region
        $region29: #{tpu_custom_call.1} parent=11 // pred_check
          %p209 = pneg %p133
        $region30: #{tpu_custom_call.1} parent=11 // pred_check_branch
          %211 = sbr.rel (%p209) target = $region32
        $region31: #{tpu_custom_call.1} parent=11 // pred_region
          _
        $region32: #{tpu_custom_call.1} parent=11 // pred_fallthru
          _
        // Predicated region
        $region33: #{tpu_custom_call.1} parent=11 // pred_check
          %p212 = pneg %p154
        $region34: #{tpu_custom_call.1} parent=11 // pred_check_branch
          %214 = sbr.rel (%p212) target = $region36
        $region35: #{tpu_custom_call.1} parent=11 // pred_region
          _
        $region36: #{tpu_custom_call.1} parent=11 // pred_fallthru
          _
      $region12: #{tpu_custom_call.1} parent=5 // pred_fallthru
        _
      %p215 = scmp.lt.s32.totalorder %s16, 4
      // Predicated region
      $region37: #{tpu_custom_call.1} parent=5 // pred_check
        %p216 = pneg %p215
      $region38: #{tpu_custom_call.1} parent=5 // pred_check_branch
        %218 = sbr.rel (%p216) target = $region40
      $region39: #{tpu_custom_call.1} parent=5 // pred_region
        _
      $region40: #{tpu_custom_call.1} parent=5 // pred_fallthru
        _
      %p219 = scmp.le.s32.totalorder 1, %s16
      %p220 = scmp.lt.s32.totalorder %s16, 5
      %p221 = pnand %p219, %p220
      %p222 = pneg %p221
      // Predicated region
      $region41: #{tpu_custom_call.1} parent=5 // pred_check
        _
      $region42: #{tpu_custom_call.1} parent=5 // pred_check_branch
        %224 = sbr.rel (%p221) target = $region44
      $region43: #{tpu_custom_call.1} parent=5 // pred_region
        %s225 = ssub.s32 %s16, 1
        %p226 = pneg %p49
        %p227 = pneg %p46
        %p228 = pneg %p70
        %p229 = pneg %p67
        %p230 = pneg %p91
        %p231 = pneg %p88
        %p232 = pneg %p112
        %p233 = pneg %p109
        %p234 = pneg %p133
        %p235 = pneg %p130
        %p236 = pneg %p154
        %p237 = pneg %p151
        %p238 = pneg %p182
        %p239 = pneg %p179
        %s240 = sand.u32 %s169, 1
        %s241 = scalar_lea.sflag [#allocation5], %s240
        %s242 = sand.u32 %s169, 1
        %s243 = smul.addr %s242, 16
        %s244 = scalar_lea.vmem [#allocation4], %s243
        %p246 = scmp.eq.s32.totalorder %s26, 0
        // Predicated region
        $region45: #{tpu_custom_call.1} parent=43 // pred_check
          %p247 = pneg %p246
        $region46: #{tpu_custom_call.1} parent=43 // pred_check_branch
          %249 = sbr.rel (%p247) target = $region48
        $region47: #{tpu_custom_call.1} parent=43 // pred_region
          %s250 = smul.u32 %s25, 3
          %s251 = sadd.s32 0, %s250
          %s252 = smul.addr %s251, 4
          %s253 = scalar_lea.vmem %s0, %s252
          // Predicated region
          $region49: #{tpu_custom_call.1} parent=47 // pred_check
            _
          $region50: #{tpu_custom_call.1} parent=47 // pred_check_branch
            %255 = sbr.rel (0) target = $region52
          $region51: #{tpu_custom_call.1} parent=47 // pred_region
            // Predicated region
            $region64: #{tpu_custom_call.1} parent=51 // pred_check
              _
            $region65: #{tpu_custom_call.1} parent=51 // pred_check_branch
              %271 = sbr.rel (0) target = $region67
            $region66: #{tpu_custom_call.1} parent=51 // pred_region
              loop: start=0, step=1, limit=1
              $region68: #{tpu_custom_call.1} parent=66 // loop_pre_header
                _
              $region69: #{tpu_custom_call.1} parent=66 // loop_header
                %s273 = sphi 0, %s277
                %p274 = scmp.ge.s32.totalorder %s273, 1
                %s278 = sphi %s253, %s253
                %s279 = sphi [#allocation2], [#allocation2]
              $region70: #{tpu_custom_call.1} parent=66 // loop_header_branch
                %276 = sbr.rel (%p274) target = $region74
              $region71: #{tpu_custom_call.1} parent=66 // loop_body
                %v280 = vld [vmem:[%s278] sm:$0xff]
                %281 = vst [vmem:[%s279] sm:$0xff] %v280
              $region72: #{tpu_custom_call.1} parent=66 // loop_footer
                %s277 = sadd.s32 1, %s273
              $region73: #{tpu_custom_call.1} parent=66 // loop_footer_branch
                %272 = sbr.rel target = $region69
              $region74: #{tpu_custom_call.1} parent=66 // loop_exit
                _
            $region67: #{tpu_custom_call.1} parent=51 // pred_fallthru
              _
            // Predicated region
            $region75: #{tpu_custom_call.1} parent=51 // pred_check
              _
            $region76: #{tpu_custom_call.1} parent=51 // pred_check_branch
              %283 = sbr.rel target = $region78
            $region77: #{tpu_custom_call.1} parent=51 // pred_region
              _
            $region78: #{tpu_custom_call.1} parent=51 // pred_fallthru
              _
          $region52: #{tpu_custom_call.1} parent=47 // pred_fallthru
            _
          // Predicated region
          $region53: #{tpu_custom_call.1} parent=47 // pred_check
            _
          $region54: #{tpu_custom_call.1} parent=47 // pred_check_branch
            %257 = sbr.rel target = $region56
          $region55: #{tpu_custom_call.1} parent=47 // pred_region
            %s259 = ssub.s32 256, 1
            loop: start=0, step=1, limit=1
            $region57: #{tpu_custom_call.1} parent=55 // loop_pre_header
              _
            $region58: #{tpu_custom_call.1} parent=55 // loop_header
              %s261 = sphi 0, %s265
              %p262 = scmp.ge.s32.totalorder %s261, 1
              %s266 = sphi %s253, %s253
              %s267 = sphi [#allocation2], [#allocation2]
            $region59: #{tpu_custom_call.1} parent=55 // loop_header_branch
              %264 = sbr.rel (%p262) target = $region63
            $region60: #{tpu_custom_call.1} parent=55 // loop_body
              %v268 = vld [vmem:[%s266] sm:%s259]
              %269 = vst [vmem:[%s267] sm:%s259] %v268
            $region61: #{tpu_custom_call.1} parent=55 // loop_footer
              %s265 = sadd.s32 1, %s261
            $region62: #{tpu_custom_call.1} parent=55 // loop_footer_branch
              %260 = sbr.rel target = $region58
            $region63: #{tpu_custom_call.1} parent=55 // loop_exit
              _
          $region56: #{tpu_custom_call.1} parent=47 // pred_fallthru
            _
          // Predicated region
          $region79: #{tpu_custom_call.1} parent=47 // pred_check
            _
          $region80: #{tpu_custom_call.1} parent=47 // pred_check_branch
            %286 = sbr.rel (0) target = $region82
          $region81: #{tpu_custom_call.1} parent=47 // pred_region
            %287 = vsyncadd [#allocation3], 128
          $region82: #{tpu_custom_call.1} parent=47 // pred_fallthru
            _
          %s288 = sadd.s32 1, %s250
          %s289 = smul.addr %s288, 4
          %s290 = scalar_lea.vmem %s0, %s289
          %s291 = scalar_lea.vmem [#allocation2], 8
          %s292 = scalar_lea.sflag [#allocation3], 1
          // Predicated region
          $region83: #{tpu_custom_call.1} parent=47 // pred_check
            _
          $region84: #{tpu_custom_call.1} parent=47 // pred_check_branch
            %294 = sbr.rel (0) target = $region86
          $region85: #{tpu_custom_call.1} parent=47 // pred_region
            // Predicated region
            $region98: #{tpu_custom_call.1} parent=85 // pred_check
              _
            $region99: #{tpu_custom_call.1} parent=85 // pred_check_branch
              %310 = sbr.rel (0) target = $region101
            $region100: #{tpu_custom_call.1} parent=85 // pred_region
              loop: start=0, step=1, limit=1
              $region102: #{tpu_custom_call.1} parent=100 // loop_pre_header
                _
              $region103: #{tpu_custom_call.1} parent=100 // loop_header
                %s312 = sphi 0, %s316
                %p313 = scmp.ge.s32.totalorder %s312, 1
                %s317 = sphi %s290, %s290
                %s318 = sphi %s291, %s291
              $region104: #{tpu_custom_call.1} parent=100 // loop_header_branch
                %315 = sbr.rel (%p313) target = $region108
              $region105: #{tpu_custom_call.1} parent=100 // loop_body
                %v319 = vld [vmem:[%s317] sm:$0xff]
                %320 = vst [vmem:[%s318] sm:$0xff] %v319
              $region106: #{tpu_custom_call.1} parent=100 // loop_footer
                %s316 = sadd.s32 1, %s312
              $region107: #{tpu_custom_call.1} parent=100 // loop_footer_branch
                %311 = sbr.rel target = $region103
              $region108: #{tpu_custom_call.1} parent=100 // loop_exit
                _
            $region101: #{tpu_custom_call.1} parent=85 // pred_fallthru
              _
            // Predicated region
            $region109: #{tpu_custom_call.1} parent=85 // pred_check
              _
            $region110: #{tpu_custom_call.1} parent=85 // pred_check_branch
              %322 = sbr.rel target = $region112
            $region111: #{tpu_custom_call.1} parent=85 // pred_region
              _
            $region112: #{tpu_custom_call.1} parent=85 // pred_fallthru
              _
          $region86: #{tpu_custom_call.1} parent=47 // pred_fallthru
            _
          // Predicated region
          $region87: #{tpu_custom_call.1} parent=47 // pred_check
            _
          $region88: #{tpu_custom_call.1} parent=47 // pred_check_branch
            %296 = sbr.rel target = $region90
          $region89: #{tpu_custom_call.1} parent=47 // pred_region
            %s298 = ssub.s32 256, 1
            loop: start=0, step=1, limit=1
            $region91: #{tpu_custom_call.1} parent=89 // loop_pre_header
              _
            $region92: #{tpu_custom_call.1} parent=89 // loop_header
              %s300 = sphi 0, %s304
              %p301 = scmp.ge.s32.totalorder %s300, 1
              %s305 = sphi %s290, %s290
              %s306 = sphi %s291, %s291
            $region93: #{tpu_custom_call.1} parent=89 // loop_header_branch
              %303 = sbr.rel (%p301) target = $region97
            $region94: #{tpu_custom_call.1} parent=89 // loop_body
              %v307 = vld [vmem:[%s305] sm:%s298]
              %308 = vst [vmem:[%s306] sm:%s298] %v307
            $region95: #{tpu_custom_call.1} parent=89 // loop_footer
              %s304 = sadd.s32 1, %s300
            $region96: #{tpu_custom_call.1} parent=89 // loop_footer_branch
              %299 = sbr.rel target = $region92
            $region97: #{tpu_custom_call.1} parent=89 // loop_exit
              _
          $region90: #{tpu_custom_call.1} parent=47 // pred_fallthru
            _
          // Predicated region
          $region113: #{tpu_custom_call.1} parent=47 // pred_check
            _
          $region114: #{tpu_custom_call.1} parent=47 // pred_check_branch
            %325 = sbr.rel (0) target = $region116
          $region115: #{tpu_custom_call.1} parent=47 // pred_region
            %326 = vsyncadd %s292, 128
          $region116: #{tpu_custom_call.1} parent=47 // pred_fallthru
            _
        $region48: #{tpu_custom_call.1} parent=43 // pred_fallthru
          _
        %p327 = scmp.gt.s32.totalorder %s26, 0
        %s328 = sadd.s32 %s26, 1
        %p329 = scmp.lt.s32.totalorder %s328, 2
        %p330 = pnand %p327, %p329
        %p331 = pneg %p330
        // Predicated region
        $region117: #{tpu_custom_call.1} parent=43 // pred_check
          _
        $region118: #{tpu_custom_call.1} parent=43 // pred_check_branch
          %333 = sbr.rel (%p330) target = $region120
        $region119: #{tpu_custom_call.1} parent=43 // pred_region
          %p334 = scmp.lt.s32.totalorder %s328, 0
          %s335 = ssub.s32 0, %s328
          %s336 = scalar_select %p334, %s335, %s328
          %s337 = sand.u32 %s336, 1
          %s338 = ssub.s32 0, %s337
          %s339 = scalar_select %p334, %s338, %s337
          %p340 = scmp.ne.s32.totalorder %s339, 0
          %p341 = scmp.lt.s32.totalorder %s339, 0
          %p342 = pnand %p341, %p340
          %p343 = pneg %p342
          %s344 = sadd.s32 %s339, 2
          %s345 = scalar_select %p343, %s344, %s339
          %s346 = smul.u32 %s328, 128
          %s347 = sshra.s32 %s346, 7
          %s348 = sand.u32 %s346, 127
          %s349 = smul.u32 %s25, 3
          %s350 = sadd.s32 %s347, %s349
          %s351 = smul.addr %s350, 4
          %s352 = scalar_lea.vmem %s0, %s351
          %s353 = smul.u32 %s345, 2
          %s354 = smul.addr %s353, 4
          %s355 = scalar_lea.vmem [#allocation2], %s354
          %s356 = scalar_lea.sflag [#allocation3], %s345
          // Predicated region
          $region121: #{tpu_custom_call.1} parent=119 // pred_check
            _
          $region122: #{tpu_custom_call.1} parent=119 // pred_check_branch
            %358 = sbr.rel (0) target = $region124
          $region123: #{tpu_custom_call.1} parent=119 // pred_region
            // Predicated region
            $region136: #{tpu_custom_call.1} parent=123 // pred_check
              _
            $region137: #{tpu_custom_call.1} parent=123 // pred_check_branch
              %374 = sbr.rel (0) target = $region139
            $region138: #{tpu_custom_call.1} parent=123 // pred_region
              loop: start=0, step=1, limit=1
              $region140: #{tpu_custom_call.1} parent=138 // loop_pre_header
                _
              $region141: #{tpu_custom_call.1} parent=138 // loop_header
                %s376 = sphi 0, %s380
                %p377 = scmp.ge.s32.totalorder %s376, 1
                %s381 = sphi %s352, %s352
                %s382 = sphi %s355, %s355
              $region142: #{tpu_custom_call.1} parent=138 // loop_header_branch
                %379 = sbr.rel (%p377) target = $region146
              $region143: #{tpu_custom_call.1} parent=138 // loop_body
                %v383 = vld [vmem:[%s381] sm:$0xff]
                %384 = vst [vmem:[%s382] sm:$0xff] %v383
              $region144: #{tpu_custom_call.1} parent=138 // loop_footer
                %s380 = sadd.s32 1, %s376
              $region145: #{tpu_custom_call.1} parent=138 // loop_footer_branch
                %375 = sbr.rel target = $region141
              $region146: #{tpu_custom_call.1} parent=138 // loop_exit
                _
            $region139: #{tpu_custom_call.1} parent=123 // pred_fallthru
              _
            // Predicated region
            $region147: #{tpu_custom_call.1} parent=123 // pred_check
              _
            $region148: #{tpu_custom_call.1} parent=123 // pred_check_branch
              %386 = sbr.rel target = $region150
            $region149: #{tpu_custom_call.1} parent=123 // pred_region
              _
            $region150: #{tpu_custom_call.1} parent=123 // pred_fallthru
              _
          $region124: #{tpu_custom_call.1} parent=119 // pred_fallthru
            _
          // Predicated region
          $region125: #{tpu_custom_call.1} parent=119 // pred_check
            _
          $region126: #{tpu_custom_call.1} parent=119 // pred_check_branch
            %360 = sbr.rel target = $region128
          $region127: #{tpu_custom_call.1} parent=119 // pred_region
            %s362 = ssub.s32 256, 1
            loop: start=0, step=1, limit=1
            $region129: #{tpu_custom_call.1} parent=127 // loop_pre_header
              _
            $region130: #{tpu_custom_call.1} parent=127 // loop_header
              %s364 = sphi 0, %s368
              %p365 = scmp.ge.s32.totalorder %s364, 1
              %s369 = sphi %s352, %s352
              %s370 = sphi %s355, %s355
            $region131: #{tpu_custom_call.1} parent=127 // loop_header_branch
              %367 = sbr.rel (%p365) target = $region135
            $region132: #{tpu_custom_call.1} parent=127 // loop_body
              %v371 = vld [vmem:[%s369] sm:%s362]
              %372 = vst [vmem:[%s370] sm:%s362] %v371
            $region133: #{tpu_custom_call.1} parent=127 // loop_footer
              %s368 = sadd.s32 1, %s364
            $region134: #{tpu_custom_call.1} parent=127 // loop_footer_branch
              %363 = sbr.rel target = $region130
            $region135: #{tpu_custom_call.1} parent=127 // loop_exit
              _
          $region128: #{tpu_custom_call.1} parent=119 // pred_fallthru
            _
          // Predicated region
          $region151: #{tpu_custom_call.1} parent=119 // pred_check
            _
          $region152: #{tpu_custom_call.1} parent=119 // pred_check_branch
            %389 = sbr.rel (0) target = $region154
          $region153: #{tpu_custom_call.1} parent=119 // pred_region
            %390 = vsyncadd %s356, 128
          $region154: #{tpu_custom_call.1} parent=119 // pred_fallthru
            _
        $region120: #{tpu_custom_call.1} parent=43 // pred_fallthru
          _
        %p391 = scmp.lt.s32.totalorder %s26, 0
        %s392 = ssub.s32 0, %s26
        %s393 = scalar_select %p391, %s392, %s26
        %s394 = sand.u32 %s393, 1
        %s395 = ssub.s32 0, %s394
        %s396 = scalar_select %p391, %s395, %s394
        %p397 = scmp.ne.s32.totalorder %s396, 0
        %p398 = scmp.lt.s32.totalorder %s396, 0
        %p399 = pnand %p398, %p397
        %p400 = pneg %p399
        %s401 = sadd.s32 %s396, 2
        %s402 = scalar_select %p400, %s401, %s396
        %s403 = smul.u32 %s402, 2
        %s404 = smul.addr %s403, 4
        %s405 = scalar_lea.vmem [#allocation2], %s404
        %s406 = scalar_lea.sflag [#allocation3], %s402
        %s407 = smul.u32 4, 1
        %s408 = smul.u32 %s407, 2
        %s409 = sshll.u32 %s408, 4
        %410 = dma.done %s406, %s409
        %v411 = vld [vmem:[%s405] sm:$0xff]
        %v412 = vunpack.c.l.bf16 %v411
        %v413 = vunpack.c.h.bf16 %v411
        %v414 = vmul.f32 %v412, 0.5
        %v415 = vmul.f32 %v413, 0.5
        %v416 = vmul.f32 %v412, 0.70710677
        %v417 = vmul.f32 %v413, 0.70710677
        %v418 = vmul.f32 %v416, %v416
        %v419 = vmin.f32 16.0, %v418
        %v420 = vmul.f32 %v419, 2.1237322e-06
        %v421 = vadd.f32 %v420, 0.00028619796
        %v422 = vmul.f32 %v419, %v421
        %v423 = vadd.f32 %v422, 0.0036580483
        %v424 = vmul.f32 %v419, %v423
        %v425 = vadd.f32 %v424, 0.05243302
        %v426 = vmul.f32 %v419, %v425
        %v427 = vadd.f32 %v426, 0.18741608
        %v428 = vmul.f32 %v419, %v427
        %v429 = vadd.f32 %v428, 1.1283791
        %v430 = vmul.f32 %v416, %v429
        %v431 = vmul.f32 %v419, 3.8918573e-05
        %v432 = vadd.f32 %v431, 0.001143296
        %v433 = vmul.f32 %v419, %v432
        %v434 = vadd.f32 %v433, 0.014752088
        %v435 = vmul.f32 %v419, %v434
        %v436 = vadd.f32 %v435, 0.112945676
        %v437 = vmul.f32 %v419, %v436
        %v438 = vadd.f32 %v437, 0.4994258
        %v439 = vmul.f32 %v419, %v438
        %v440 = vadd.f32 %v439, 1.0
        %v441 = vrcp.pop %v440
        %v442 = vmul.f32 %v440, %v441
        %v443 = vsub.f32 1.0, %v442
        %v444 = vmul.f32 %v441, %v443
        %v445 = vadd.f32 %v441, %v444
        %vm446 = vweird.f32 %v440
        %vm447 = vweird.f32 %v441
        %vm448 = vmor %vm446, %vm447
        %v449 = vsel %vm448, %v441, %v445
        %v450 = vand.u32 2147483647, %v440
        %vm451 = vcmp.eq.f32.partialorder %v450, 8.507059e+37
        %v452 = vand.u32 %v440, 2147483648
        %v453 = vor.u32 1.1754944e-38, %v452
        %v454 = vsel %vm451, %v453, %v449
        %v455 = vmul.f32 %v430, %v454
        %v456 = vmin.f32 %v455, 1.0
        %v457 = vmax.f32 %v456, -1.0
        %v458 = vmul.f32 %v417, %v417
        %v459 = vmin.f32 16.0, %v458
        %v460 = vmul.f32 %v459, 2.1237322e-06
        %v461 = vadd.f32 %v460, 0.00028619796
        %v462 = vmul.f32 %v459, %v461
        %v463 = vadd.f32 %v462, 0.0036580483
        %v464 = vmul.f32 %v459, %v463
        %v465 = vadd.f32 %v464, 0.05243302
        %v466 = vmul.f32 %v459, %v465
        %v467 = vadd.f32 %v466, 0.18741608
        %v468 = vmul.f32 %v459, %v467
        %v469 = vadd.f32 %v468, 1.1283791
        %v470 = vmul.f32 %v417, %v469
        %v471 = vmul.f32 %v459, 3.8918573e-05
        %v472 = vadd.f32 %v471, 0.001143296
        %v473 = vmul.f32 %v459, %v472
        %v474 = vadd.f32 %v473, 0.014752088
        %v475 = vmul.f32 %v459, %v474
        %v476 = vadd.f32 %v475, 0.112945676
        %v477 = vmul.f32 %v459, %v476
        %v478 = vadd.f32 %v477, 0.4994258
        %v479 = vmul.f32 %v459, %v478
        %v480 = vadd.f32 %v479, 1.0
        %v481 = vrcp.pop %v480
        %v482 = vmul.f32 %v480, %v481
        %v483 = vsub.f32 1.0, %v482
        %v484 = vmul.f32 %v481, %v483
        %v485 = vadd.f32 %v481, %v484
        %vm486 = vweird.f32 %v480
        %vm487 = vweird.f32 %v481
        %vm488 = vmor %vm486, %vm487
        %v489 = vsel %vm488, %v481, %v485
        %v490 = vand.u32 2147483647, %v480
        %vm491 = vcmp.eq.f32.partialorder %v490, 8.507059e+37
        %v492 = vand.u32 %v480, 2147483648
        %v493 = vor.u32 1.1754944e-38, %v492
        %v494 = vsel %vm491, %v493, %v489
        %v495 = vmul.f32 %v470, %v494
        %v496 = vmin.f32 %v495, 1.0
        %v497 = vmax.f32 %v496, -1.0
        %v498 = vadd.f32 %v457, 1.0
        %v499 = vadd.f32 %v497, 1.0
        %v500 = vmul.f32 %v414, %v498
        %v501 = vmul.f32 %v415, %v499
        %v502 = vpack.c.bf16 %v501, %v500
        %v504 = vunpack.c.l.b16 %v502
        %v505 = vunpack.c.h.b16 %v502
        %v506 = vpack.c.b16 %v504, %v504
        %v507 = vpack.c.b16 %v505, %v505
        %508 = vrot.lane.b32.xlu0 %v506, 126
        %v509 = vpop.permute.xlu0 %508
        %510 = vrot.lane.b32.xlu0 %v507, 126
        %v511 = vpop.permute.xlu0 %510
        %vm512 = vcmask 1031168
        %v513 = vsel %vm512, %v509, %v511
        %514 = vrot.lane.b32.xlu0 %v506, 124
        %v515 = vpop.permute.xlu0 %514
        %516 = vrot.lane.b32.xlu0 %v507, 124
        %v517 = vpop.permute.xlu0 %516
        %vm518 = vcmask 1014784
        %v519 = vsel %vm518, %v515, %v517
        %vm520 = vcmask 1043456
        %v523 = vsel %vm520, %v506, %v513
        %v527 = vsel %vm520, %v507, %v511
        %v529 = vld [vmem:[%s1] sm:$0xf]
        %v530 = vld [vmem:[%s1 + $0x4] sm:$0xf]
        %v531 = vld [vmem:[%s2] sm:$0xff]
        %v532 = vld [vmem:[%s2 + $0x8] sm:$0xff]
        %534 = vset.pattern.permute.xlu0 0
        %535 = vperm.xlu0 %534, %v531
        %v536 = vpop.permute.xlu0 %535
        %539 = vset.pattern.permute.xlu0 0
        %540 = vperm.xlu0 %539, %v532
        %v541 = vpop.permute.xlu0 %540
        %v545 = vunpack.c.l.b16 %v529
        %v546 = vunpack.c.l.b16 %v530
        %v547 = vpack.c.b16 %v546, %v545
        %vm548 = vcmask 195584
        %v550 = vsel %vm548, %v547, 0
        %v553 = vsel %vm520, %v519, 0
        %v556 = vsel %vm520, %v517, 0
        %558 = vmatpush.bf16.msra.mxu0 0
        %559 = vmatpush.bf16.msra.mxu0 0
        %560 = vmatpush.bf16.msra.mxu0 0
        %561 = vmatpush.bf16.msra.mxu0 0
        %562 = vmatpush.bf16.msra.mxu0 0
        %563 = vmatpush.bf16.msra.mxu0 0
        %564 = vmatpush.bf16.msra.mxu0 %v553
        %565 = vmatpush.bf16.msra.mxu0 %v523
        %566 = vmatmul.bf16.gmra.mxu0 %v550
        %v567 = vpop.f32.mrf.mxu0
        %v568 = vadd.f32 %v536, %v567
        %v569 = vpop.f32.mrf.mxu0
        %v570 = vadd.f32 %v541, %v569
        %571 = vdwg.mxu0
        %572 = vmatpush.bf16.msra.mxu0 0
        %573 = vmatpush.bf16.msra.mxu0 0
        %574 = vmatpush.bf16.msra.mxu0 0
        %575 = vmatpush.bf16.msra.mxu0 0
        %576 = vmatpush.bf16.msra.mxu0 0
        %577 = vmatpush.bf16.msra.mxu0 0
        %578 = vmatpush.bf16.msra.mxu0 %v556
        %579 = vmatpush.bf16.msra.mxu0 %v527
        %580 = vmatmul.bf16.gmra.mxu0 %v550
        %v581 = vpop.f32.mrf.mxu0
        %v582 = vadd.f32 %v536, %v581
        %v583 = vpop.f32.mrf.mxu0
        %v584 = vadd.f32 %v541, %v583
        %585 = vdwg.mxu0
        %s586 = smul.u32 %s26, 128
        %s587 = ssub.s32 %s586, 2
        %v588 = vlaneseq
        %v589 = vand.u32 %v588, 127
        %v590 = vadd.s32 %v589, 128
        %v591 = vstv %s587
        %v592 = vadd.s32 %v591, %v589
        %v593 = vadd.s32 %v591, %v590
        %vm594 = vcmp.ge.s32.totalorder %v592, 0
        %vm595 = vcmp.ge.s32.totalorder %v593, 0
        %vm596 = vcmp.lt.s32.totalorder %v592, 160
        %vm597 = vcmp.lt.s32.totalorder %v593, 160
        %vm598 = vmand %vm594, %vm596
        %vm599 = vmand %vm595, %vm597
        %v600 = vsel %vm598, 1, 0
        %v601 = vsel %vm599, 1, 0
        %vm602 = vcmp.eq.s32.totalorder %v600, 1
        %vm603 = vcmp.eq.s32.totalorder %v601, 1
        %v604 = vsel %vm602, %v568, 0.0
        %v605 = vsel %vm603, %v582, 0.0
        %v606 = vsel %vm602, %v570, 0.0
        %v607 = vsel %vm603, %v584, 0.0
        %v608 = vmul.f32 %v604, 0.5
        %v609 = vmul.f32 %v605, 0.5
        %v610 = vmul.f32 %v606, 0.5
        %v611 = vmul.f32 %v607, 0.5
        %v612 = vmul.f32 %v604, 0.70710677
        %v613 = vmul.f32 %v605, 0.70710677
        %v614 = vmul.f32 %v606, 0.70710677
        %v615 = vmul.f32 %v607, 0.70710677
        %v616 = vmul.f32 %v612, %v612
        %v617 = vmin.f32 16.0, %v616
        %v618 = vmul.f32 %v617, 2.1237322e-06
        %v619 = vadd.f32 %v618, 0.00028619796
        %v620 = vmul.f32 %v617, %v619
        %v621 = vadd.f32 %v620, 0.0036580483
        %v622 = vmul.f32 %v617, %v621
        %v623 = vadd.f32 %v622, 0.05243302
        %v624 = vmul.f32 %v617, %v623
        %v625 = vadd.f32 %v624, 0.18741608
        %v626 = vmul.f32 %v617, %v625
        %v627 = vadd.f32 %v626, 1.1283791
        %v628 = vmul.f32 %v612, %v627
        %v629 = vmul.f32 %v617, 3.8918573e-05
        %v630 = vadd.f32 %v629, 0.001143296
        %v631 = vmul.f32 %v617, %v630
        %v632 = vadd.f32 %v631, 0.014752088
        %v633 = vmul.f32 %v617, %v632
        %v634 = vadd.f32 %v633, 0.112945676
        %v635 = vmul.f32 %v617, %v634
        %v636 = vadd.f32 %v635, 0.4994258
        %v637 = vmul.f32 %v617, %v636
        %v638 = vadd.f32 %v637, 1.0
        %v639 = vrcp.pop %v638
        %v640 = vmul.f32 %v638, %v639
        %v641 = vsub.f32 1.0, %v640
        %v642 = vmul.f32 %v639, %v641
        %v643 = vadd.f32 %v639, %v642
        %vm644 = vweird.f32 %v638
        %vm645 = vweird.f32 %v639
        %vm646 = vmor %vm644, %vm645
        %v647 = vsel %vm646, %v639, %v643
        %v648 = vand.u32 2147483647, %v638
        %vm649 = vcmp.eq.f32.partialorder %v648, 8.507059e+37
        %v650 = vand.u32 %v638, 2147483648
        %v651 = vor.u32 1.1754944e-38, %v650
        %v652 = vsel %vm649, %v651, %v647
        %v653 = vmul.f32 %v628, %v652
        %v654 = vmin.f32 %v653, 1.0
        %v655 = vmax.f32 %v654, -1.0
        %v656 = vmul.f32 %v613, %v613
        %v657 = vmin.f32 16.0, %v656
        %v658 = vmul.f32 %v657, 2.1237322e-06
        %v659 = vadd.f32 %v658, 0.00028619796
        %v660 = vmul.f32 %v657, %v659
        %v661 = vadd.f32 %v660, 0.0036580483
        %v662 = vmul.f32 %v657, %v661
        %v663 = vadd.f32 %v662, 0.05243302
        %v664 = vmul.f32 %v657, %v663
        %v665 = vadd.f32 %v664, 0.18741608
        %v666 = vmul.f32 %v657, %v665
        %v667 = vadd.f32 %v666, 1.1283791
        %v668 = vmul.f32 %v613, %v667
        %v669 = vmul.f32 %v657, 3.8918573e-05
        %v670 = vadd.f32 %v669, 0.001143296
        %v671 = vmul.f32 %v657, %v670
        %v672 = vadd.f32 %v671, 0.014752088
        %v673 = vmul.f32 %v657, %v672
        %v674 = vadd.f32 %v673, 0.112945676
        %v675 = vmul.f32 %v657, %v674
        %v676 = vadd.f32 %v675, 0.4994258
        %v677 = vmul.f32 %v657, %v676
        %v678 = vadd.f32 %v677, 1.0
        %v679 = vrcp.pop %v678
        %v680 = vmul.f32 %v678, %v679
        %v681 = vsub.f32 1.0, %v680
        %v682 = vmul.f32 %v679, %v681
        %v683 = vadd.f32 %v679, %v682
        %vm684 = vweird.f32 %v678
        %vm685 = vweird.f32 %v679
        %vm686 = vmor %vm684, %vm685
        %v687 = vsel %vm686, %v679, %v683
        %v688 = vand.u32 2147483647, %v678
        %vm689 = vcmp.eq.f32.partialorder %v688, 8.507059e+37
        %v690 = vand.u32 %v678, 2147483648
        %v691 = vor.u32 1.1754944e-38, %v690
        %v692 = vsel %vm689, %v691, %v687
        %v693 = vmul.f32 %v668, %v692
        %v694 = vmin.f32 %v693, 1.0
        %v695 = vmax.f32 %v694, -1.0
        %v696 = vmul.f32 %v614, %v614
        %v697 = vmin.f32 16.0, %v696
        %v698 = vmul.f32 %v697, 2.1237322e-06
        %v699 = vadd.f32 %v698, 0.00028619796
        %v700 = vmul.f32 %v697, %v699
        %v701 = vadd.f32 %v700, 0.0036580483
        %v702 = vmul.f32 %v697, %v701
        %v703 = vadd.f32 %v702, 0.05243302
        %v704 = vmul.f32 %v697, %v703
        %v705 = vadd.f32 %v704, 0.18741608
        %v706 = vmul.f32 %v697, %v705
        %v707 = vadd.f32 %v706, 1.1283791
        %v708 = vmul.f32 %v614, %v707
        %v709 = vmul.f32 %v697, 3.8918573e-05
        %v710 = vadd.f32 %v709, 0.001143296
        %v711 = vmul.f32 %v697, %v710
        %v712 = vadd.f32 %v711, 0.014752088
        %v713 = vmul.f32 %v697, %v712
        %v714 = vadd.f32 %v713, 0.112945676
        %v715 = vmul.f32 %v697, %v714
        %v716 = vadd.f32 %v715, 0.4994258
        %v717 = vmul.f32 %v697, %v716
        %v718 = vadd.f32 %v717, 1.0
        %v719 = vrcp.pop %v718
        %v720 = vmul.f32 %v718, %v719
        %v721 = vsub.f32 1.0, %v720
        %v722 = vmul.f32 %v719, %v721
        %v723 = vadd.f32 %v719, %v722
        %vm724 = vweird.f32 %v718
        %vm725 = vweird.f32 %v719
        %vm726 = vmor %vm724, %vm725
        %v727 = vsel %vm726, %v719, %v723
        %v728 = vand.u32 2147483647, %v718
        %vm729 = vcmp.eq.f32.partialorder %v728, 8.507059e+37
        %v730 = vand.u32 %v718, 2147483648
        %v731 = vor.u32 1.1754944e-38, %v730
        %v732 = vsel %vm729, %v731, %v727
        %v733 = vmul.f32 %v708, %v732
        %v734 = vmin.f32 %v733, 1.0
        %v735 = vmax.f32 %v734, -1.0
        %v736 = vmul.f32 %v615, %v615
        %v737 = vmin.f32 16.0, %v736
        %v738 = vmul.f32 %v737, 2.1237322e-06
        %v739 = vadd.f32 %v738, 0.00028619796
        %v740 = vmul.f32 %v737, %v739
        %v741 = vadd.f32 %v740, 0.0036580483
        %v742 = vmul.f32 %v737, %v741
        %v743 = vadd.f32 %v742, 0.05243302
        %v744 = vmul.f32 %v737, %v743
        %v745 = vadd.f32 %v744, 0.18741608
        %v746 = vmul.f32 %v737, %v745
        %v747 = vadd.f32 %v746, 1.1283791
        %v748 = vmul.f32 %v615, %v747
        %v749 = vmul.f32 %v737, 3.8918573e-05
        %v750 = vadd.f32 %v749, 0.001143296
        %v751 = vmul.f32 %v737, %v750
        %v752 = vadd.f32 %v751, 0.014752088
        %v753 = vmul.f32 %v737, %v752
        %v754 = vadd.f32 %v753, 0.112945676
        %v755 = vmul.f32 %v737, %v754
        %v756 = vadd.f32 %v755, 0.4994258
        %v757 = vmul.f32 %v737, %v756
        %v758 = vadd.f32 %v757, 1.0
        %v759 = vrcp.pop %v758
        %v760 = vmul.f32 %v758, %v759
        %v761 = vsub.f32 1.0, %v760
        %v762 = vmul.f32 %v759, %v761
        %v763 = vadd.f32 %v759, %v762
        %vm764 = vweird.f32 %v758
        %vm765 = vweird.f32 %v759
        %vm766 = vmor %vm764, %vm765
        %v767 = vsel %vm766, %v759, %v763
        %v768 = vand.u32 2147483647, %v758
        %vm769 = vcmp.eq.f32.partialorder %v768, 8.507059e+37
        %v770 = vand.u32 %v758, 2147483648
        %v771 = vor.u32 1.1754944e-38, %v770
        %v772 = vsel %vm769, %v771, %v767
        %v773 = vmul.f32 %v748, %v772
        %v774 = vmin.f32 %v773, 1.0
        %v775 = vmax.f32 %v774, -1.0
        %v776 = vadd.f32 %v655, 1.0
        %v777 = vadd.f32 %v695, 1.0
        %v778 = vadd.f32 %v735, 1.0
        %v779 = vadd.f32 %v775, 1.0
        %v780 = vmul.f32 %v608, %v776
        %v781 = vmul.f32 %v609, %v777
        %v782 = vmul.f32 %v610, %v778
        %v783 = vmul.f32 %v611, %v779
        %v784 = vpack.c.bf16 %v781, %v780
        %v785 = vpack.c.bf16 %v783, %v782
        %v788 = vunpack.c.l.b16 %v784
        %v789 = vunpack.c.l.b16 %v785
        %v790 = vpack.c.b16 %v789, %v788
        %v792 = vunpack.c.h.b16 %v784
        %v793 = vunpack.c.h.b16 %v785
        %v794 = vpack.c.b16 %v793, %v792
        %795 = vrot.lane.b32.xlu0 %v790, 126
        %v796 = vpop.permute.xlu0 %795
        %797 = vrot.lane.b32.xlu0 %v794, 126
        %v798 = vpop.permute.xlu0 %797
        %v799 = vsel %vm512, %v796, %v798
        %801 = vrot.lane.b32.xlu0 %v790, 124
        %v802 = vpop.permute.xlu0 %801
        %803 = vrot.lane.b32.xlu0 %v794, 124
        %v804 = vpop.permute.xlu0 %803
        %v805 = vsel %vm518, %v802, %v804
        %v807 = vld [vmem:[%s3] sm:$0xf]
        %v808 = vld [vmem:[%s3 + $0x4] sm:$0xf]
        %v809 = vld [vmem:[%s4] sm:$0xff]
        %v810 = vld [vmem:[%s4 + $0x8] sm:$0xff]
        %812 = vset.pattern.permute.xlu0 0
        %813 = vperm.xlu0 %812, %v809
        %v814 = vpop.permute.xlu0 %813
        %817 = vset.pattern.permute.xlu0 0
        %818 = vperm.xlu0 %817, %v810
        %v819 = vpop.permute.xlu0 %818
        %v823 = vunpack.c.l.b16 %v807
        %v824 = vunpack.c.l.b16 %v808
        %v825 = vpack.c.b16 %v824, %v823
        %vm826 = vcmask 392192
        %v828 = vsel %vm826, %v825, 0
        %830 = vmatpush.bf16.msra.mxu0 0
        %831 = vmatpush.bf16.msra.mxu0 0
        %832 = vmatpush.bf16.msra.mxu0 0
        %833 = vmatpush.bf16.msra.mxu0 0
        %834 = vmatpush.bf16.msra.mxu0 0
        %835 = vmatpush.bf16.msra.mxu0 %v805
        %836 = vmatpush.bf16.msra.mxu0 %v799
        %837 = vmatpush.bf16.msra.mxu0 %v790
        %838 = vmatmul.bf16.gmra.mxu0 %v828
        %v839 = vpop.f32.mrf.mxu0
        %v840 = vadd.f32 %v814, %v839
        %v841 = vpop.f32.mrf.mxu0
        %v842 = vadd.f32 %v819, %v841
        %843 = vdwg.mxu0
        %v844 = vld [vmem:[%s5] sm:$0xf]
        %v845 = vld [vmem:[%s5 + $0x4] sm:$0xf]
        %v846 = vld [vmem:[%s6] sm:$0xff]
        %v847 = vld [vmem:[%s6 + $0x8] sm:$0xff]
        %849 = vset.pattern.permute.xlu0 0
        %850 = vperm.xlu0 %849, %v846
        %v851 = vpop.permute.xlu0 %850
        %854 = vset.pattern.permute.xlu0 0
        %855 = vperm.xlu0 %854, %v847
        %v856 = vpop.permute.xlu0 %855
        %v860 = vunpack.c.l.b16 %v844
        %v861 = vunpack.c.l.b16 %v845
        %v862 = vpack.c.b16 %v861, %v860
        %v864 = vunpack.c.l.b16 %v411
        %v865 = vunpack.c.h.b16 %v411
        %v866 = vpack.c.b16 %v864, %v864
        %v867 = vpack.c.b16 %v865, %v865
        %868 = vrot.lane.b32.xlu0 %v866, 124
        %v869 = vpop.permute.xlu0 %868
        %870 = vrot.lane.b32.xlu0 %v867, 124
        %v871 = vpop.permute.xlu0 %870
        %v872 = vsel %vm518, %v869, %v871
        %vm873 = vcmask 64512
        %v875 = vsel %vm873, %v862, 0
        %v878 = vsel %vm520, %v872, 0
        %880 = vmatpush.bf16.msra.mxu0 0
        %881 = vmatpush.bf16.msra.mxu0 0
        %882 = vmatpush.bf16.msra.mxu0 0
        %883 = vmatpush.bf16.msra.mxu0 0
        %884 = vmatpush.bf16.msra.mxu0 0
        %885 = vmatpush.bf16.msra.mxu0 0
        %886 = vmatpush.bf16.msra.mxu0 0
        %887 = vmatpush.bf16.msra.mxu0 %v878
        %888 = vmatmul.bf16.gmra.mxu0 %v875
        %v889 = vpop.f32.mrf.mxu0
        %v890 = vadd.f32 %v851, %v889
        %v891 = vpop.f32.mrf.mxu0
        %v892 = vadd.f32 %v856, %v891
        %893 = vdwg.mxu0
        %v894 = vadd.f32 %v840, %v890
        %v895 = vadd.f32 %v842, %v892
        %896 = vst [vmem:[%s244] sm:$0xff] %v894
        %897 = vst [vmem:[%s244 + $0x8] sm:$0xff] %v895
        %s898 = sand.u32 %s169, 1
        %s899 = scalar_lea.sflag [#allocation5], %s898
        %s900 = sand.u32 %s169, 1
        %s901 = smul.addr %s900, 16
        %s902 = scalar_lea.vmem [#allocation4], %s901
        // Predicated region
        $region155: #{tpu_custom_call.1} parent=43 // pred_check
          %p903 = pneg %p179
        $region156: #{tpu_custom_call.1} parent=43 // pred_check_branch
          %905 = sbr.rel (%p903) target = $region158
        $region157: #{tpu_custom_call.1} parent=43 // pred_region
          %907 = vsyncadd %s899, 0
          %s908 = smul.addr %s25, 4
          %s909 = sadd.s32 %s26, %s908
          %s910 = smul.addr %s909, 8
          %s911 = scalar_lea.hbm %s7, %s910
          %s912 = sshll.u32 %s902, 4
          %s913 = int_to_ptr.vmem [resolvable:$true] %s912
          %s914 = sshll.u32 %s911, 4
          %s915 = int_to_ptr.hbm [resolvable:$true] %s914
          %920 = dma.vmem_to_hbm [thread:$0]  %s913, 256, %s915, %s899, 128, 256, 8
        $region158: #{tpu_custom_call.1} parent=43 // pred_fallthru
          _
      $region44: #{tpu_custom_call.1} parent=5 // pred_fallthru
        _
      %p921 = scmp.le.s32.totalorder 2, %s16
      // Predicated region
      $region159: #{tpu_custom_call.1} parent=5 // pred_check
        %p922 = pneg %p921
      $region160: #{tpu_custom_call.1} parent=5 // pred_check_branch
        %924 = sbr.rel (%p922) target = $region162
      $region161: #{tpu_custom_call.1} parent=5 // pred_region
        %s925 = ssub.s32 %s16, 2
        // Predicated region
        $region163: #{tpu_custom_call.1} parent=161 // pred_check
          %p926 = pneg %p185
        $region164: #{tpu_custom_call.1} parent=161 // pred_check_branch
          %928 = sbr.rel (%p926) target = $region166
        $region165: #{tpu_custom_call.1} parent=161 // pred_region
          %s929 = sand.u32 %s170, 1
          %s930 = scalar_lea.sflag [#allocation5], %s929
          %s931 = sand.u32 %s170, 1
          %s932 = smul.addr %s931, 16
          %s933 = scalar_lea.vmem [#allocation4], %s932
          %935 = dma.done %s930, 256
        $region166: #{tpu_custom_call.1} parent=161 // pred_fallthru
          _
      $region162: #{tpu_custom_call.1} parent=5 // pred_fallthru
        _
    $region6: #{tpu_custom_call.1} parent=1 // loop_footer
      %s20 = sadd.s32 1, %s16
    $region7: #{tpu_custom_call.1} parent=1 // loop_footer_branch
      %15 = sbr.rel target = $region3
    $region8: #{tpu_custom_call.1} parent=1 // loop_exit
      _
    %936 = vsyncpa [#allocation5], 1
    %s937 = scalar_lea.sflag [#allocation5], 1
    %938 = vsyncpa %s937, 1
  %939 = vsyncmov [#allocation3]
  %s940 = vpop.sfrf %939
  %p941 = scmp.eq.s32.totalorder %s940, 0
  %p942 = pneg %p941
  %944 = shalt.err (%p942)
  %s945 = scalar_lea.sflag [#allocation3], 1
  %946 = vsyncmov %s945
  %s947 = vpop.sfrf %946
  %p948 = scmp.eq.s32.totalorder %s947, 0
  %p949 = pneg %p948
  %951 = shalt.err (%p949)

</llo_original>
